<compile_context>
chip_gen: v5e
topology: v5e:2x2
jax: 0.10.0
libtpu: 0.0.40
codegen_flags: <defaults>
</compile_context>

<pallas_src>
import jax
import jax.numpy as jnp
from jax.experimental import pallas as pl
from jax.experimental.pallas import tpu as pltpu

BATCH_TILE = 4096   # rows per grid step for large batches (multiple of 8);
                    # ~8 MiB double-buffered VMEM -> fits v5e/v6e/v7x defaults.


def _sender_onco_feat_kernel(x_ref, w_ref, b_ref, o_ref):
    # x_ref: (TB, IN), w_ref: (IN, OUT), b_ref: (1, OUT), o_ref: (TB, OUT)
    y = jnp.dot(x_ref[...], w_ref[...], preferred_element_type=jnp.float32)
    y = y + b_ref[...]                       # bias broadcast over batch rows
    o_ref[...] = jnp.maximum(y, 0.0)         # ReLU (VPU; plenty of slack)


def prepare_params(weight, bias):
    """One-time param prep: transpose to (in, out); no lane padding needed.

    weight: (out_features, in_features)  -- PyTorch nn.Linear layout
    bias:   (out_features,)
    """
    out_features, in_features = weight.shape
    w_t = jnp.asarray(weight, jnp.float32).T            # (in, out)
    b_row = jnp.asarray(bias, jnp.float32).reshape(1, out_features)
    return w_t, b_row


def sender_onco_feat(x, w_t, b_row):
    """Forward pass: relu(x @ W^T + b).

    x:     (B, in_features) float32
    w_t:   (in_features, out_features) pre-transposed weight
    b_row: (1, out_features) bias
    returns (B, out_features) float32
    """
    B, in_features = x.shape
    out_features = w_t.shape[1]

    # Small batch -> single full-extent block (always legal, even if B % 8 != 0);
    # large batch -> 4096-row tiles (multiple of 8 sublanes), partial last
    # block masked by Pallas.
    tb = B if B <= BATCH_TILE else BATCH_TILE
    grid = (pl.cdiv(B, tb),)

    cost = pl.CostEstimate(
        flops=2 * B * in_features * out_features,
        transcendentals=0,
        bytes_accessed=B * 4 * (in_features + out_features)
        + 4 * (in_features * out_features + out_features),
    )

    y = pl.pallas_call(
        _sender_onco_feat_kernel,
        out_shape=jax.ShapeDtypeStruct((B, out_features), jnp.float32),
        grid=grid,
        in_specs=[
            pl.BlockSpec((tb, in_features), lambda i: (i, 0)),        # x: batch-tiled
            pl.BlockSpec((in_features, out_features), lambda i: (0, 0)),  # W: resident
            pl.BlockSpec((1, out_features), lambda i: (0, 0)),            # b: resident
        ],
        out_specs=pl.BlockSpec((tb, out_features), lambda i: (i, 0)),
        compiler_params=pltpu.CompilerParams(
            dimension_semantics=("parallel",),   # megacore-shardable on v7x
        ),
        cost_estimate=cost,
    )(x, w_t, b_row)

    return y


def init_params(key, input_size=28, hidden_size=20):
    # Deterministic init mimicking nn.Linear's U(-1/sqrt(fan_in), 1/sqrt(fan_in)).
    k_w, k_b = jax.random.split(key)
    bound = 1.0 / jnp.sqrt(jnp.float32(input_size))
    weight = jax.random.uniform(
        k_w, (hidden_size, input_size), jnp.float32, minval=-bound, maxval=bound
    )
    bias = jax.random.uniform(
        k_b, (hidden_size,), jnp.float32, minval=-bound, maxval=bound
    )
    return weight, bias


if __name__ == "__main__":
    key = jax.random.PRNGKey(0)
    k_x, k_x2, k_p = jax.random.split(key, 3)

    input_size, hidden_size = 28, 20
    weight, bias = init_params(k_p, input_size, hidden_size)
    # One-time parameter prep (transpose), not per forward call.
    w_t, b_row = prepare_params(weight, bias)

    # Small-batch check (single full-extent block).
    batch = 8
    x = jax.random.normal(k_x, (batch, input_size), jnp.float32)
    out = jax.block_until_ready(sender_onco_feat(x, w_t, b_row))
    ref = jnp.maximum(x @ weight.T + bias, 0.0)
    assert out.shape == (batch, hidden_size)
    assert jnp.allclose(out, ref, atol=1e-5, rtol=1e-5)

    # Larger, non-tile-multiple batch to exercise the tiled / partial-block path
    # (still tiny data: ~1 MB total).
    batch2 = 8200
    x2 = jax.random.normal(k_x2, (batch2, input_size), jnp.float32)
    out2 = jax.block_until_ready(sender_onco_feat(x2, w_t, b_row))
    ref2 = jnp.maximum(x2 @ weight.T + bias, 0.0)
    assert out2.shape == (batch2, hidden_size)
    assert jnp.allclose(out2, ref2, atol=1e-5, rtol=1e-5)

    print("KERNEL_OK")
</pallas_src>

<mosaic_0001>
module attributes {stable_mosaic.version = 11 : i64} {
  func.func @_sender_onco_feat_kernel(%arg0: i32, %arg1: memref<8x28xf32, #tpu.memory_space<vmem>>, %arg2: memref<28x20xf32, #tpu.memory_space<vmem>>, %arg3: memref<1x20xf32, #tpu.memory_space<vmem>>, %arg4: memref<8x20xf32, #tpu.memory_space<vmem>>) attributes {dimension_semantics = [#tpu.dimension_semantics<parallel>], iteration_bounds = array<i64: 1>, scalar_prefetch = 0 : i64, scratch_operands = 0 : i64, tpu.core_type = #tpu.core_type<tc>, window_params = [{transform_indices = @transform_0, window_bounds = array<i64: 8, 28>}, {pipeline_mode = #tpu.pipeline_mode<synchronous>, transform_indices = @transform_1, window_bounds = array<i64: 28, 20>}, {pipeline_mode = #tpu.pipeline_mode<synchronous>, transform_indices = @transform_2, window_bounds = array<i64: 1, 20>}, {transform_indices = @transform_3, window_bounds = array<i64: 8, 20>}]} {
    %c0 = arith.constant 0 : index
    %c0_0 = arith.constant 0 : index
    %0 = vector.load %arg1[%c0, %c0_0] : memref<8x28xf32, #tpu.memory_space<vmem>>, vector<8x28xf32>
    %c0_1 = arith.constant 0 : index
    %c0_2 = arith.constant 0 : index
    %1 = vector.load %arg2[%c0_1, %c0_2] : memref<28x20xf32, #tpu.memory_space<vmem>>, vector<28x20xf32>
    %cst = arith.constant dense<0.000000e+00> : vector<8x20xf32>
    %2 = tpu.matmul %0, %1, %cst {dimension_numbers = #tpu.dot_dimension_numbers<[1], [0], [0], [1], [0, 0, 1, 1], [], []>} : vector<8x28xf32>, vector<28x20xf32>, vector<8x20xf32> -> vector<8x20xf32>
    %c0_3 = arith.constant 0 : index
    %c0_4 = arith.constant 0 : index
    %3 = vector.load %arg3[%c0_3, %c0_4] : memref<1x20xf32, #tpu.memory_space<vmem>>, vector<1x20xf32>
    %4 = vector.broadcast %3 : vector<1x20xf32> to vector<8x20xf32>
    %5 = arith.addf %2, %4 : vector<8x20xf32>
    %cst_5 = arith.constant 0.000000e+00 : f32
    %6 = vector.broadcast %cst_5 : f32 to vector<8x20xf32>
    %7 = arith.maximumf %5, %6 : vector<8x20xf32>
    %c0_6 = arith.constant 0 : index
    %c0_7 = arith.constant 0 : index
    %8 = vector.load %arg4[%c0_6, %c0_7] : memref<8x20xf32, #tpu.memory_space<vmem>>, vector<8x20xf32>
    tpu.vector_store %arg4[%c0_6, %c0_7], %7 {strides = array<i32>} : memref<8x20xf32, #tpu.memory_space<vmem>>, vector<8x20xf32>,
    return
  }
  func.func @transform_0(%arg0: i32) -> (i32, i32) {
    %c0_i32 = arith.constant 0 : i32
    %c0_i32_0 = arith.constant 0 : i32
    return %arg0, %c0_i32 : i32, i32
  }
  func.func @transform_1(%arg0: i32) -> (i32, i32) {
    %c0_i32 = arith.constant 0 : i32
    %c0_i32_0 = arith.constant 0 : i32
    %c0_i32_1 = arith.constant 0 : i32
    return %c0_i32, %c0_i32_0 : i32, i32
  }
  func.func @transform_2(%arg0: i32) -> (i32, i32) {
    %c0_i32 = arith.constant 0 : i32
    %c0_i32_0 = arith.constant 0 : i32
    %c0_i32_1 = arith.constant 0 : i32
    return %c0_i32, %c0_i32_0 : i32, i32
  }
  func.func @transform_3(%arg0: i32) -> (i32, i32) {
    %c0_i32 = arith.constant 0 : i32
    %c0_i32_0 = arith.constant 0 : i32
    return %arg0, %c0_i32 : i32, i32
  }
}

</mosaic_0001>

<llo_original>
// kernel: tpu_custom_call.1
$region0: #{tpu_custom_call.1}
  #allocation0 [shape = 'u32[]', space=smem, size = 0x4, offset = 0x4, fixed_abs, tag = 'smem constant byte address 0x4 - core index']
  #allocation1 [shape = 'u32[72,128]{1,0:T(1,128)}', space=vmem, size = 0x9000, scoped, tag = 'internal scratch']
  %s0 = inlined_call_operand.vmem [shape: f32[8,28], index: 0, kind: input, shape index: {}]
  %s1 = inlined_call_operand.vmem [shape: f32[28,20], index: 1, kind: input, shape index: {}]
  %s2 = inlined_call_operand.vmem [shape: f32[1,20], index: 2, kind: input, shape index: {}]
  %s3 = inlined_call_operand.hbm [shape: f32[8,20], index: 3, kind: output, shape index: {}]
  %s4 = sld [smem:[#allocation0]]
  $region22: #{tpu_custom_call.1} parent=0
    _
  %s6 = ssub.s32 1, %s4
  %s7 = scalar_select 0, %s6, %s4
  $region1: #{tpu_custom_call.1} parent=0
    #allocation2 [shape = 'u8[4096]{0}', space=vmem, size = 0x1000, scoped, tag = 'output window, operand 0, single buffered']
    #allocation3 [shape = 's32[1]{0}', space=sflag, size = 0x4, scoped, tag = 'scoped memory for tpu_custom_call.1']
    %8 = vsyncpa [#allocation3], 0
    // Predicated region
    $region2: #{tpu_custom_call.1} parent=1 // pred_check
      _
    $region3: #{tpu_custom_call.1} parent=1 // pred_check_branch
      %10 = sbr.rel (0) target = $region5
    $region4: #{tpu_custom_call.1} parent=1 // pred_region
      _
    $region5: #{tpu_custom_call.1} parent=1 // pred_fallthru
      _
    // Predicated region
    $region6: #{tpu_custom_call.1} parent=1 // pred_check
      _
    $region7: #{tpu_custom_call.1} parent=1 // pred_check_branch
      %12 = sbr.rel (0) target = $region9
    $region8: #{tpu_custom_call.1} parent=1 // pred_region
      _
    $region9: #{tpu_custom_call.1} parent=1 // pred_fallthru
      _
    // Predicated region
    $region10: #{tpu_custom_call.1} parent=1 // pred_check
      _
    $region11: #{tpu_custom_call.1} parent=1 // pred_check_branch
      %14 = sbr.rel (0) target = $region13
    $region12: #{tpu_custom_call.1} parent=1 // pred_region
      _
    $region13: #{tpu_custom_call.1} parent=1 // pred_fallthru
      _
    %v15 = vld [vmem:[%s0] sm:$0xff]
    %v16 = vld [vmem:[%s1] sm:$0xff]
    %v17 = vld [vmem:[%s1 + $0x8] sm:$0xff]
    %v18 = vld [vmem:[%s1 + $0x10] sm:$0xff]
    %v19 = vld [vmem:[%s1 + $0x18] sm:$0xf]
    %v20 = vld [vmem:[%s2] sm:$0x1]
    %v22 = vperm.slane %v20, 0
    %vm24 = vcmask 228352
    %v26 = vsel %vm24, %v15, 0
    %vm28 = vcmask 1043456
    %v30 = vsel %vm28, %v19, 0
    %32 = vmatpush.msra.mxu0 0.0
    %33 = vmatpush.msra.mxu0 0.0
    %34 = vmatpush.msra.mxu0 0.0
    %35 = vmatpush.msra.mxu0 0.0
    %36 = vmatpush.msra.mxu0 0.0
    %37 = vmatpush.msra.mxu0 0.0
    %38 = vmatpush.msra.mxu0 0.0
    %39 = vmatpush.msra.mxu0 0.0
    %40 = vmatpush.msra.mxu0 0.0
    %41 = vmatpush.msra.mxu0 0.0
    %42 = vmatpush.msra.mxu0 0.0
    %43 = vmatpush.msra.mxu0 0.0
    %44 = vmatpush.msra.mxu0 %v30
    %45 = vmatpush.msra.mxu0 %v18
    %46 = vmatpush.msra.mxu0 %v17
    %47 = vmatpush.msra.mxu0 %v16
    %48 = vmatmul.f32.gmra.mxu0 %v26
    %v49 = vpop.f32.mrf.mxu0
    %v50 = vadd.f32 %v22, %v49
    %51 = vdwg.mxu0
    %v52 = vmax.f32 %v50, 0.0
    %vm53 = vcmask 162816
    %54 = vst.msk [vmem:[#allocation2] sm:$0xff] %vm53, %v52
    // Predicated region
    $region14: #{tpu_custom_call.1} parent=1 // pred_check
      _
    $region15: #{tpu_custom_call.1} parent=1 // pred_check_branch
      %56 = sbr.rel (0) target = $region17
    $region16: #{tpu_custom_call.1} parent=1 // pred_region
      %58 = vsyncadd [#allocation3], 0
      %s60 = sshll.u32 [#allocation2], 4
      %s61 = int_to_ptr.vmem [resolvable:$true] %s60
      %s62 = sshll.u32 %s3, 4
      %s63 = int_to_ptr.hbm [resolvable:$true] %s62
      %65 = dma.vmem_to_hbm [thread:$0]  %s61, 128, %s63, [#allocation3]
    $region17: #{tpu_custom_call.1} parent=1 // pred_fallthru
      _
    // Predicated region
    $region18: #{tpu_custom_call.1} parent=1 // pred_check
      _
    $region19: #{tpu_custom_call.1} parent=1 // pred_check_branch
      %67 = sbr.rel (0) target = $region21
    $region20: #{tpu_custom_call.1} parent=1 // pred_region
      %69 = dma.done [#allocation3], 128
    $region21: #{tpu_custom_call.1} parent=1 // pred_fallthru
      _
    %70 = vsyncpa [#allocation3], 1

</llo_original>
